<compile_context>
chip_gen: v7x
topology: tpu7x:2x2x1
jax: 0.10.0
libtpu: 0.0.40
codegen_flags: <defaults>
</compile_context>

<pallas_src>
import functools

import jax
import jax.numpy as jnp
from jax import lax
from jax.experimental import pallas as pl
from jax.experimental.pallas import tpu as pltpu

_LANE = 128


def _int_power(x, n):
    """x**n for integer n >= 1 via square-and-multiply (short VPU dep chain)."""
    assert n >= 1
    result = None
    base = x
    while n > 0:
        if n & 1:
            result = base if result is None else result * base
        n >>= 1
        if n:
            base = base * base
    return result


def _gem_kernel(x_ref, o_ref, acc_ref, *, p, inv_p, p_int, p_half_int, eps,
                hw, thw, mask_last, compute_dtype):
    """One (TN, THW) tile: accumulate sum(clamp(x, eps)**p) per row into an
    f32 VMEM accumulator; apply mean + 1/p root on the last HW chunk."""
    k = pl.program_id(1)
    is_last = k == pl.num_programs(1) - 1

    @pl.when(k == 0)
    def _init():
        acc_ref[...] = jnp.zeros_like(acc_ref)

    x = x_ref[...].astype(compute_dtype)
    x = jnp.maximum(x, jnp.asarray(eps, compute_dtype))     # clamp(min=eps)

    if p_int is not None:
        # Integer exponent (default p=3): square-and-multiply on the VPU keeps
        # the single EUP slot free and the per-vreg dependency chain short.
        xp = _int_power(x, p_int)
    elif p_half_int is not None:
        # Half-integer exponent: x**(n+0.5) = x**n * sqrt(x) -> one EUP sqrt,
        # keeps the kernel HBM-bound even on v5e's slow EUP.
        root = jnp.sqrt(x)
        xp = root if p_half_int == 0 else _int_power(x, p_half_int) * root
    else:
        # General float-p fallback (exp/log on the single EUP slot). Fine on
        # v6e/v7x; on v5e this regime is EUP-bound rather than HBM-bound.
        xp = jnp.power(x, p)

    xp = xp.astype(jnp.float32)

    if mask_last:
        # HW is chunked and THW does not divide it: only the *last* chunk is
        # ragged, so only that chunk pays the iota/compare/select mask.
        @pl.when(jnp.logical_not(is_last))
        def _full_chunk():
            acc_ref[...] += jnp.sum(xp, axis=-1, keepdims=True)

        @pl.when(is_last)
        def _ragged_chunk():
            col = k * thw + lax.broadcasted_iota(jnp.int32, xp.shape, 1)
            acc_ref[...] += jnp.sum(jnp.where(col < hw, xp, 0.0),
                                    axis=-1, keepdims=True)
    else:
        acc_ref[...] += jnp.sum(xp, axis=-1, keepdims=True)

    @pl.when(is_last)
    def _finalize():
        # NOTE: padded rows of a ragged last row tile may hold garbage / NaN
        # here; Pallas only writes back the valid region, so this is benign.
        mean = acc_ref[...] * (1.0 / hw)          # adaptive_avg_pool2d -> 1x1
        o_ref[...] = jnp.power(mean, inv_p).astype(o_ref.dtype)


def _vmem_capacity_bytes():
    """Physical VMEM of the local chip; conservative (v7x, 64 MiB) fallback."""
    try:
        info = pltpu.get_tpu_info()
        cap = getattr(info, "vmem_capacity_bytes", None)
        if cap:
            return int(cap)
    except Exception:
        pass
    return 64 * 1024 * 1024


def gem_pooling(x, p=3.0, eps=1e-6):
    """Generalized-mean pooling, output_size=1: (B, C, H, W) -> (B, C, 1, 1)."""
    # TODO(synk): only the output_size=1 (global pooling) case of the module is
    # implemented; general adaptive output sizes are not.
    B, C, H, W = x.shape
    N, HW = B * C, H * W
    x2 = x.reshape(N, HW)

    p = float(p)
    p_int = int(p) if p.is_integer() and 1.0 <= p <= 32.0 else None
    p_half_int = None
    if p_int is None and (2.0 * p).is_integer() and 0.5 <= p <= 32.5:
        p_half_int = int(p - 0.5)

    itemsize = jnp.dtype(x.dtype).itemsize
    # Sub-f32 floats: clamp/pow in the input dtype (matches PyTorch; halves
    # elementwise-temp footprint on v6e/v7x); the row sum is always f32.
    compute_dtype = x.dtype if x.dtype == jnp.bfloat16 else jnp.float32

    # Dtype sublane tile (f32: 8, bf16: 16, int8/fp8: 32).
    if itemsize >= 4:
        sub = 8
    elif itemsize == 2:
        sub = 16
    else:
        sub = 32

    # ---- Generation-aware budgets -------------------------------------------
    # v5e/v6e: 128 MiB physical VMEM -> 8 MiB blocks, 64 MiB scoped limit.
    # v7x:      64 MiB physical VMEM -> 4 MiB blocks, 48 MiB scoped limit
    # (2 pipeline buffers per input + f32 temporaries must fit).
    if _vmem_capacity_bytes() >= 128 * 1024 * 1024:
        target_block_bytes = 8 * 1024 * 1024
        vmem_limit = 64 * 1024 * 1024
    else:
        target_block_bytes = 4 * 1024 * 1024
        vmem_limit = 48 * 1024 * 1024

    # ---- Lane (HW) axis ------------------------------------------------------
    # Whole row whenever it fits; otherwise prefer a multiple-of-128 chunk that
    # divides HW exactly (no mask at all), else fixed 8192-wide chunks with the
    # ragged mask paid only on the last chunk.
    THW_MAX = 8192
    if HW <= THW_MAX:
        THW = HW
    else:
        THW = THW_MAX
        for cand in range(THW_MAX, 2048 - 1, -_LANE):
            if HW % cand == 0:
                THW = cand
                break
    mask_last = (HW % THW) != 0

    # ---- Sublane (row) axis --------------------------------------------------
    # Size TN from the *padded* block footprint (lane dim rounded up to 128,
    # sublane dim to the dtype tile) so double-buffering + f32 temps stay
    # inside the scoped-VMEM limit on every generation.
    THW_pad = -(-THW // _LANE) * _LANE
    tn_raw = target_block_bytes // (THW_pad * itemsize)
    tn_raw = max(sub, (tn_raw // sub) * sub)
    if N <= sub:
        TN = N                                    # block == full row dim
    else:
        TN = max(sub, min(tn_raw, (N // sub) * sub))
        # Keep >= 2 row tiles when N allows so the "parallel" row axis can be
        # sharded across v7x's two TensorCores.
        if TN >= N and N >= 2 * sub:
            half = -(-N // 2)
            TN = max(sub, -(-half // sub) * sub)

    grid = (pl.cdiv(N, TN), pl.cdiv(HW, THW))

    kernel = functools.partial(
        _gem_kernel, p=p, inv_p=1.0 / p, p_int=p_int, p_half_int=p_half_int,
        eps=float(eps), hw=HW, thw=THW, mask_last=mask_last,
        compute_dtype=compute_dtype)

    # Advisory cost estimate (elementwise muls of the pow chain + clamp + add).
    if p_int is not None:
        emul = max(p_int.bit_length() + bin(p_int).count("1") - 2, 0)
        etrans = 0
    elif p_half_int is not None:
        emul = (p_half_int.bit_length() + bin(p_half_int).count("1") - 1
                if p_half_int >= 1 else 0)
        etrans = 1
    else:
        emul, etrans = 2, 2
    flops = N * HW * (emul + 2) + 2 * N
    transcendentals = N * HW * etrans + 2 * N
    bytes_accessed = N * HW * itemsize + N * itemsize

    out = pl.pallas_call(
        kernel,
        out_shape=jax.ShapeDtypeStruct((N, 1), x.dtype),
        grid_spec=pltpu.PrefetchScalarGridSpec(
            num_scalar_prefetch=0,
            grid=grid,
            # Default double-buffering only: a 3rd buffer cannot beat HBM
            # bandwidth on this streaming kernel and just eats VMEM.
            in_specs=[pl.BlockSpec((TN, THW), lambda i, k: (i, k))],
            # Output traffic is N*itemsize bytes total (negligible vs input
            # bytes); a lane-dense (1, TN) layout would need an in-kernel
            # (TN,1)->(1,TN) relayout and is not worth the lowering risk.
            out_specs=pl.BlockSpec((TN, 1), lambda i, k: (i, 0)),
            scratch_shapes=[pltpu.VMEM((TN, 1), jnp.float32)],
        ),
        compiler_params=pltpu.CompilerParams(
            dimension_semantics=("parallel", "arbitrary"),
            vmem_limit_bytes=vmem_limit,
        ),
        cost_estimate=pl.CostEstimate(
            flops=flops,
            transcendentals=transcendentals,
            bytes_accessed=bytes_accessed),
    )(x2)

    return out.reshape(B, C, 1, 1)


def gem_pooling_ref(x, p=3.0, eps=1e-6):
    xf = jnp.maximum(x.astype(jnp.float32), eps)
    m = jnp.mean(xf ** p, axis=(2, 3), keepdims=True)
    return (m ** (1.0 / p)).astype(x.dtype)


def _check(x, p, eps, rtol=1e-4, atol=1e-5):
    y = jax.block_until_ready(gem_pooling(x, p=p, eps=eps))
    y_ref = gem_pooling_ref(x, p=p, eps=eps)
    assert y.shape == y_ref.shape, (y.shape, y_ref.shape)
    yf, rf = y.astype(jnp.float32), y_ref.astype(jnp.float32)
    assert jnp.allclose(yf, rf, rtol=rtol, atol=atol), (
        float(jnp.max(jnp.abs(yf - rf))))
    return y


if __name__ == "__main__":
    # GeneralizedMeanPooling(norm=3.0, output_size=1, eps=1e-6) — no params.
    p, eps = 3.0, 1e-6
    key = jax.random.PRNGKey(0)

    # Primary case (matches the module's typical use).
    x = jax.random.uniform(key, (2, 4, 16, 16), dtype=jnp.float32)
    y = _check(x, p, eps)
    assert y.shape == (2, 4, 1, 1), y.shape

    k1, k2, k3, k4 = jax.random.split(key, 4)

    # Ragged row-tile path (N = 15 not a multiple of the row tile).
    _check(jax.random.uniform(k1, (3, 5, 16, 16), dtype=jnp.float32), p, eps)

    # Small-HW (7x7 GeM head): lane padding + >=2 row tiles for megacore.
    _check(jax.random.uniform(k2, (2, 32, 7, 7), dtype=jnp.float32), p, eps)

    # Chunked-HW path with an exact 128-multiple divisor (HW=10752, no mask).
    _check(jax.random.uniform(k3, (1, 8, 96, 112), dtype=jnp.float32), p, eps)

    # Chunked-HW path with a ragged, masked last chunk (HW = 8320 > 8192).
    _check(jax.random.uniform(k4, (1, 8, 65, 128), dtype=jnp.float32), p, eps)

    # bf16 input: clamp/pow in bf16 (matches PyTorch's in-dtype pow).
    xb = jax.random.uniform(key, (2, 4, 16, 16),
                            dtype=jnp.float32).astype(jnp.bfloat16)
    _check(xb, p, eps, rtol=3e-2, atol=3e-2)

    # Half-integer exponent fast path (x**2.5 = x**2 * sqrt(x)).
    _check(x, 2.5, eps)

    print("KERNEL_OK")
</pallas_src>

<mosaic_0001>
module attributes {stable_mosaic.version = 11 : i64} {
  func.func @_gem_kernel(%arg0: i32, %arg1: i32, %arg2: memref<8x256xf32, #tpu.memory_space<vmem>>, %arg3: memref<8x1xf32, #tpu.memory_space<vmem>>, %arg4: memref<8x1xf32, #tpu.memory_space<vmem>>) attributes {dimension_semantics = [#tpu.dimension_semantics<parallel>, #tpu.dimension_semantics<arbitrary>], iteration_bounds = array<i64: 1, 1>, scalar_prefetch = 0 : i64, scratch_operands = 1 : i64, tpu.core_type = #tpu.core_type<tc>, window_params = [{transform_indices = @transform_0, window_bounds = array<i64: 8, 256>}, {transform_indices = @transform_1, window_bounds = array<i64: 8, 1>}]} {
    %c0_i32 = arith.constant 0 : i32
    %0 = arith.cmpi eq, %arg1, %c0_i32 : i32
    %c0_i32_0 = arith.constant 0 : i32
    %1 = arith.cmpi eq, %arg1, %c0_i32_0 : i32
    %2 = arith.extui %1 : i1 to i32
    %c0_i32_1 = arith.constant 0 : i32
    %3 = arith.cmpi ne, %2, %c0_i32_1 : i32
    scf.if %3 {
      %cst_9 = arith.constant 0.000000e+00 : f32
      %16 = vector.broadcast %cst_9 : f32 to vector<8x1xf32>
      %c0_10 = arith.constant 0 : index
      %c0_11 = arith.constant 0 : index
      %17 = vector.load %arg4[%c0_10, %c0_11] : memref<8x1xf32, #tpu.memory_space<vmem>>, vector<8x1xf32>
      tpu.vector_store %arg4[%c0_10, %c0_11], %16 {strides = array<i32>} : memref<8x1xf32, #tpu.memory_space<vmem>>, vector<8x1xf32>,
    } else {
    }
    %c0 = arith.constant 0 : index
    %c0_2 = arith.constant 0 : index
    %4 = vector.load %arg2[%c0, %c0_2] : memref<8x256xf32, #tpu.memory_space<vmem>>, vector<8x256xf32>
    %cst = arith.constant 9.99999997E-7 : f32
    %5 = vector.broadcast %cst : f32 to vector<8x256xf32>
    %6 = arith.maximumf %4, %5 : vector<8x256xf32>
    %7 = arith.mulf %6, %6 : vector<8x256xf32>
    %8 = arith.mulf %6, %7 : vector<8x256xf32>
    %c0_3 = arith.constant 0 : index
    %c0_4 = arith.constant 0 : index
    %9 = vector.load %arg4[%c0_3, %c0_4] : memref<8x1xf32, #tpu.memory_space<vmem>>, vector<8x1xf32>
    %cst_5 = arith.constant dense<0.000000e+00> : vector<8xf32>
    %10 = vector.multi_reduction <add>, %8, %cst_5 [1] : vector<8x256xf32> to vector<8xf32>
    %11 = vector.shape_cast %10 : vector<8xf32> to vector<8x1xf32>
    %12 = arith.addf %9, %11 : vector<8x1xf32>
    %c0_6 = arith.constant 0 : index
    %c0_7 = arith.constant 0 : index
    %13 = vector.load %arg4[%c0_6, %c0_7] : memref<8x1xf32, #tpu.memory_space<vmem>>, vector<8x1xf32>
    tpu.vector_store %arg4[%c0_6, %c0_7], %12 {strides = array<i32>} : memref<8x1xf32, #tpu.memory_space<vmem>>, vector<8x1xf32>,
    %14 = arith.extui %0 : i1 to i32
    %c0_i32_8 = arith.constant 0 : i32
    %15 = arith.cmpi ne, %14, %c0_i32_8 : i32
    scf.if %15 {
      %c0_9 = arith.constant 0 : index
      %c0_10 = arith.constant 0 : index
      %16 = vector.load %arg4[%c0_9, %c0_10] : memref<8x1xf32, #tpu.memory_space<vmem>>, vector<8x1xf32>
      %cst_11 = arith.constant 3.906250e-03 : f32
      %17 = vector.broadcast %cst_11 : f32 to vector<8x1xf32>
      %18 = arith.mulf %16, %17 : vector<8x1xf32>
      %cst_12 = arith.constant 0.333333343 : f32
      %19 = vector.broadcast %cst_12 : f32 to vector<8x1xf32>
      %20 = math.powf %18, %19 : vector<8x1xf32>
      %c0_13 = arith.constant 0 : index
      %c0_14 = arith.constant 0 : index
      %21 = vector.load %arg3[%c0_13, %c0_14] : memref<8x1xf32, #tpu.memory_space<vmem>>, vector<8x1xf32>
      tpu.vector_store %arg3[%c0_13, %c0_14], %20 {strides = array<i32>} : memref<8x1xf32, #tpu.memory_space<vmem>>, vector<8x1xf32>,
    } else {
    }
    return
  }
  func.func @transform_0(%arg0: i32, %arg1: i32) -> (i32, i32) {
    %c0_i32 = arith.constant 0 : i32
    return %arg0, %arg1 : i32, i32
  }
  func.func @transform_1(%arg0: i32, %arg1: i32) -> (i32, i32) {
    %c0_i32 = arith.constant 0 : i32
    %c0_i32_0 = arith.constant 0 : i32
    return %arg0, %c0_i32 : i32, i32
  }
}

</mosaic_0001>

<llo_original>
// kernel: tpu_custom_call.1
$region0: #{tpu_custom_call.1}
  #allocation0 [shape = 'u32[]', space=smem, size = 0x4, offset = 0x4, fixed_abs, tag = 'smem constant byte address 0x4 - core index']
  #allocation1 [shape = 'u32[144,128]{1,0:T(1,128)}', space=vmem, size = 0x12000, scoped, tag = 'internal scratch']
  #allocation2 [shape = 'f32[8,1]{1,0:T(8,128)}', space=vmem, size = 0x1000, scoped, tag = 'scratch operand']
  %s0 = inlined_call_operand.hbm [shape: f32[8,256], index: 0, kind: input, shape index: {}]
  %s1 = inlined_call_operand.vmem [shape: f32[8,1], index: 1, kind: output, shape index: {}]
  %s2 = sld [smem:[#allocation0]]
  $region26: #{tpu_custom_call.1} parent=0
    _
  %s4 = ssub.s32 1, %s2
  %s5 = scalar_select 0, %s4, %s2
  $region1: #{tpu_custom_call.1} parent=0
    #allocation3 [shape = 'u8[8192]{0}', space=vmem, size = 0x2000, scoped, tag = 'input window, operand 0, single buffered']
    #allocation4 [shape = 's32[1]{0}', space=sflag, size = 0x4, scoped, tag = 'scoped memory for tpu_custom_call.1']
    %6 = vsyncpa [#allocation4], 0
    // Predicated region
    $region2: #{tpu_custom_call.1} parent=1 // pred_check
      _
    $region3: #{tpu_custom_call.1} parent=1 // pred_check_branch
      %8 = sbr.rel (0) target = $region5
    $region4: #{tpu_custom_call.1} parent=1 // pred_region
      %s10 = ssub.s32 256, 256
      %11 = vsyncadd [#allocation4], %s10
      %s13 = sshll.u32 [#allocation3], 4
      %s14 = int_to_ptr.vmem [resolvable:$true] %s13
      %16 = dma.hbm_to_vmem [thread:$0]  %s0, 256, %s14, [#allocation4]
    $region5: #{tpu_custom_call.1} parent=1 // pred_fallthru
      _
    // Predicated region
    $region6: #{tpu_custom_call.1} parent=1 // pred_check
      _
    $region7: #{tpu_custom_call.1} parent=1 // pred_check_branch
      %18 = sbr.rel (0) target = $region9
    $region8: #{tpu_custom_call.1} parent=1 // pred_region
      %19 = dma.done [#allocation4], 256
    $region9: #{tpu_custom_call.1} parent=1 // pred_fallthru
      _
    %p20 = scmp.eq.s32.totalorder 0, 0
    // Predicated region
    $region10: #{tpu_custom_call.1} parent=1 // pred_check
      %p21 = pneg %p20
    $region11: #{tpu_custom_call.1} parent=1 // pred_check_branch
      %23 = sbr.rel (%p21) target = $region13
    $region12: #{tpu_custom_call.1} parent=1 // pred_region
      %vm24 = vcmask 7168
      %25 = vst.msk [vmem:[#allocation2] sm:$0xff] %vm24, 0.0
    $region13: #{tpu_custom_call.1} parent=1 // pred_fallthru
      _
    %v26 = vld [vmem:[#allocation3] sm:$0xff]
    %v27 = vld [vmem:[#allocation3 + $0x8] sm:$0xff]
    %v28 = vmax.f32 %v26, 1e-06
    %v29 = vmax.f32 %v27, 1e-06
    %v30 = vmul.f32 %v28, %v28
    %v31 = vmul.f32 %v29, %v29
    %v32 = vmul.f32 %v28, %v30
    %v33 = vmul.f32 %v29, %v31
    %v34 = vld [vmem:[#allocation2] sm:$0xff]
    %v35 = vadd.f32 %v32, %v33
    %36 = vadd.xlane.f32.xlu0 %v35
    %v37 = vpop.xlane.xlu0 %36
    %v38 = vadd.f32 %v34, %v37
    %vm39 = vcmask 7168
    %40 = vst.msk [vmem:[#allocation2] sm:$0xff] %vm39, %v38
    // Predicated region
    $region14: #{tpu_custom_call.1} parent=1 // pred_check
      %p41 = pneg %p20
    $region15: #{tpu_custom_call.1} parent=1 // pred_check_branch
      %43 = sbr.rel (%p41) target = $region17
    $region16: #{tpu_custom_call.1} parent=1 // pred_region
      %v44 = vld [vmem:[#allocation2] sm:$0xff]
      %v45 = vmul.f32 %v44, 0.00390625
      %v46 = vpow.f32 %v45, 0.33333334
      %47 = vst.msk [vmem:[%s1] sm:$0xff] %vm39, %v46
    $region17: #{tpu_custom_call.1} parent=1 // pred_fallthru
      _
    // Predicated region
    $region18: #{tpu_custom_call.1} parent=1 // pred_check
      _
    $region19: #{tpu_custom_call.1} parent=1 // pred_check_branch
      %49 = sbr.rel (0) target = $region21
    $region20: #{tpu_custom_call.1} parent=1 // pred_region
      _
    $region21: #{tpu_custom_call.1} parent=1 // pred_fallthru
      _
    // Predicated region
    $region22: #{tpu_custom_call.1} parent=1 // pred_check
      _
    $region23: #{tpu_custom_call.1} parent=1 // pred_check_branch
      %51 = sbr.rel (0) target = $region25
    $region24: #{tpu_custom_call.1} parent=1 // pred_region
      _
    $region25: #{tpu_custom_call.1} parent=1 // pred_fallthru
      _
    %52 = vsyncpa [#allocation4], 1

</llo_original>
